<compile_context>
chip_gen: v7x
topology: tpu7x:2x2x1
jax: 0.10.0
libtpu: 0.0.40
codegen_flags: <defaults>
</compile_context>

<pallas_src>
import functools
import math

import jax
import jax.numpy as jnp
from jax import lax
from jax.experimental import pallas as pl
from jax.experimental.pallas import tpu as pltpu


def _embedding_gather_kernel(ids_ref, emb_hbm, o_ref, copy_sem, *,
                             scale, block_tokens):
    """Gather `block_tokens` embedding rows from HBM straight into o_ref, scale in place.

    ids_ref  : SMEM (N_pad,) int32 token ids (scalar prefetch, pre-clamped)
    emb_hbm  : HBM  (V, D_pad) embedding table (memory_space=pl.ANY)
    o_ref    : VMEM (TN, D_pad) pipelined output block (DMA destination)
    copy_sem : single shared DMA semaphore for all row copies of this block
    """
    base = pl.program_id(0) * block_tokens

    # Issue all row DMAs for this token block against ONE shared semaphore; they all
    # stay in flight so the block is HBM-latency/BW bound, not issue-serial.
    def _issue(t, carry):
        tok = ids_ref[base + t]
        pltpu.make_async_copy(
            emb_hbm.at[pl.ds(tok, 1), :],
            o_ref.at[pl.ds(t, 1), :],
            copy_sem,
        ).start()
        return carry

    lax.fori_loop(0, block_tokens, _issue, 0, unroll=8)

    # Single bulk wait: the TN row copies each signalled `copy_sem` by their byte count;
    # a wait descriptor covering the whole (TN, D_pad) block consumes exactly that total.
    pltpu.make_async_copy(o_ref, o_ref, copy_sem).wait()

    # Fused sqrt(d_model) scaling, in place, on the lane-dense output block.
    o_ref[...] = (o_ref[...].astype(jnp.float32) * scale).astype(o_ref.dtype)


def input_embeddings(x, emb_table, d_model, *, block_tokens=512):
    """x: int token ids (batch, seq). Returns (batch, seq, d_model) in table dtype."""
    b, s = x.shape
    v, d = emb_table.shape
    assert d == d_model
    n = b * s
    scale = math.sqrt(d_model)

    # Hoisted id clamp (kept out of the hot DMA-issue loop). PyTorch would IndexError
    # on out-of-range ids; we clamp to a defined table row instead.
    ids = jnp.clip(x.reshape(n).astype(jnp.int32), 0, v - 1)

    # Lane-dense layout: pad d_model up to a multiple of 128 so each row DMA and the
    # output store are full-lane / unmasked. Sliced back to d below.
    d_pad = ((d + 127) // 128) * 128
    emb = emb_table if d_pad == d else jnp.pad(emb_table, ((0, 0), (0, d_pad - d)))

    itemsize = jnp.dtype(emb_table.dtype).itemsize

    # Token-block size: multiple of 8; keep >=2 grid steps when possible (v7x: 2 TCs);
    # keep the double-buffered output block within a VMEM budget safe on all generations.
    tn = min(block_tokens, n)
    if n >= 16:
        tn = min(tn, (n + 1) // 2)                       # >=2 grid steps
    vmem_budget = 24 * 1024 * 1024                       # double-buffered out block budget
    max_tn_vmem = max(8, (vmem_budget // (2 * d_pad * itemsize)) // 8 * 8)
    tn = min(tn, max_tn_vmem)
    tn = max(8, ((tn + 7) // 8) * 8)

    n_pad = pl.cdiv(n, tn) * tn
    if n_pad != n:
        # Padded tokens gather row 0 (valid) and are sliced off below.
        ids = jnp.pad(ids, (0, n_pad - n))

    grid = (n_pad // tn,)

    out = pl.pallas_call(
        functools.partial(_embedding_gather_kernel, scale=scale, block_tokens=tn),
        out_shape=jax.ShapeDtypeStruct((n_pad, d_pad), emb_table.dtype),
        grid_spec=pltpu.PrefetchScalarGridSpec(
            num_scalar_prefetch=1,                              # ids -> SMEM
            grid=grid,
            in_specs=[pl.BlockSpec(memory_space=pl.ANY)],       # table stays in HBM
            out_specs=pl.BlockSpec((tn, d_pad), lambda i, ids_sref: (i, 0)),
            scratch_shapes=[
                pltpu.SemaphoreType.DMA(()),                    # one shared DMA sem
            ],
        ),
        compiler_params=pltpu.CompilerParams(
            dimension_semantics=("parallel",),                  # token blocks independent
            vmem_limit_bytes=64 * 1024 * 1024,
        ),
    )(ids, emb)

    return out[:n, :d].reshape(b, s, d)


if __name__ == "__main__":
    # Small, deterministic setup consistent with the module's forward.
    d_model = 32
    vocab_size = 64
    batch, seq = 2, 8

    key = jax.random.PRNGKey(0)
    k_emb, k_ids = jax.random.split(key)

    # nn.Embedding default init ~ N(0, 1), float32.
    emb_table = jax.random.normal(k_emb, (vocab_size, d_model), dtype=jnp.float32)
    x = jax.random.randint(k_ids, (batch, seq), 0, vocab_size, dtype=jnp.int32)

    out = input_embeddings(x, emb_table, d_model)
    out = jax.block_until_ready(out)

    # Pure-JAX reference check.
    ref = jnp.take(emb_table, x, axis=0) * math.sqrt(d_model)
    assert out.shape == (batch, seq, d_model)
    assert out.dtype == jnp.float32
    assert jnp.allclose(out, ref, atol=1e-5, rtol=1e-5)

    print("KERNEL_OK")
</pallas_src>

<mosaic_0001>
module attributes {stable_mosaic.version = 11 : i64} {
  func.func @_embedding_gather_kernel(%arg0: i32, %arg1: memref<16xi32, #tpu.memory_space<smem>>, %arg2: memref<64x128xf32, #tpu.memory_space<any>>, %arg3: memref<8x128xf32, #tpu.memory_space<vmem>>, %arg4: memref<!tpu.dma_semaphore, #tpu.memory_space<semaphore_mem>>) attributes {dimension_semantics = [#tpu.dimension_semantics<parallel>], iteration_bounds = array<i64: 2>, scalar_prefetch = 1 : i64, scratch_operands = 1 : i64, tpu.core_type = #tpu.core_type<tc>, window_params = [{}, {transform_indices = @transform_1, window_bounds = array<i64: 8, 128>}]} {
    %c8_i32 = arith.constant 8 : i32
    %0 = arith.muli %arg0, %c8_i32 : i32
    %c0_i32 = arith.constant 0 : i32
    %1 = arith.addi %0, %c0_i32 : i32
    %2 = arith.index_cast %1 : i32 to index
    %3 = memref.load %arg1[%2] : memref<16xi32, #tpu.memory_space<smem>>
    %c0_i32_0 = arith.constant 0 : i32
    %4 = tpu.memref_slice %arg2[%3, %c0_i32_0] : memref<64x128xf32, #tpu.memory_space<any>> -> memref<1x128xf32, #tpu.memory_space<any>>
    %c0_i32_1 = arith.constant 0 : i32
    %5 = tpu.memref_slice %arg3[%c0_i32, %c0_i32_1] : memref<8x128xf32, #tpu.memory_space<vmem>> -> memref<1x128xf32, #tpu.memory_space<vmem>>
    tpu.enqueue_dma source(%4 : memref<1x128xf32, #tpu.memory_space<any>>) target(%5 : memref<1x128xf32, #tpu.memory_space<vmem>>) target_semaphore(%arg4 : memref<!tpu.dma_semaphore, #tpu.memory_space<semaphore_mem>>)
    %c1_i32 = arith.constant 1 : i32
    %6 = arith.addi %0, %c1_i32 : i32
    %7 = arith.index_cast %6 : i32 to index
    %8 = memref.load %arg1[%7] : memref<16xi32, #tpu.memory_space<smem>>
    %c0_i32_2 = arith.constant 0 : i32
    %9 = tpu.memref_slice %arg2[%8, %c0_i32_2] : memref<64x128xf32, #tpu.memory_space<any>> -> memref<1x128xf32, #tpu.memory_space<any>>
    %c0_i32_3 = arith.constant 0 : i32
    %10 = tpu.memref_slice %arg3[%c1_i32, %c0_i32_3] : memref<8x128xf32, #tpu.memory_space<vmem>> -> memref<1x128xf32, #tpu.memory_space<vmem>>
    tpu.enqueue_dma source(%9 : memref<1x128xf32, #tpu.memory_space<any>>) target(%10 : memref<1x128xf32, #tpu.memory_space<vmem>>) target_semaphore(%arg4 : memref<!tpu.dma_semaphore, #tpu.memory_space<semaphore_mem>>)
    %c2_i32 = arith.constant 2 : i32
    %11 = arith.addi %0, %c2_i32 : i32
    %12 = arith.index_cast %11 : i32 to index
    %13 = memref.load %arg1[%12] : memref<16xi32, #tpu.memory_space<smem>>
    %c0_i32_4 = arith.constant 0 : i32
    %14 = tpu.memref_slice %arg2[%13, %c0_i32_4] : memref<64x128xf32, #tpu.memory_space<any>> -> memref<1x128xf32, #tpu.memory_space<any>>
    %c0_i32_5 = arith.constant 0 : i32
    %15 = tpu.memref_slice %arg3[%c2_i32, %c0_i32_5] : memref<8x128xf32, #tpu.memory_space<vmem>> -> memref<1x128xf32, #tpu.memory_space<vmem>>
    tpu.enqueue_dma source(%14 : memref<1x128xf32, #tpu.memory_space<any>>) target(%15 : memref<1x128xf32, #tpu.memory_space<vmem>>) target_semaphore(%arg4 : memref<!tpu.dma_semaphore, #tpu.memory_space<semaphore_mem>>)
    %c3_i32 = arith.constant 3 : i32
    %16 = arith.addi %0, %c3_i32 : i32
    %17 = arith.index_cast %16 : i32 to index
    %18 = memref.load %arg1[%17] : memref<16xi32, #tpu.memory_space<smem>>
    %c0_i32_6 = arith.constant 0 : i32
    %19 = tpu.memref_slice %arg2[%18, %c0_i32_6] : memref<64x128xf32, #tpu.memory_space<any>> -> memref<1x128xf32, #tpu.memory_space<any>>
    %c0_i32_7 = arith.constant 0 : i32
    %20 = tpu.memref_slice %arg3[%c3_i32, %c0_i32_7] : memref<8x128xf32, #tpu.memory_space<vmem>> -> memref<1x128xf32, #tpu.memory_space<vmem>>
    tpu.enqueue_dma source(%19 : memref<1x128xf32, #tpu.memory_space<any>>) target(%20 : memref<1x128xf32, #tpu.memory_space<vmem>>) target_semaphore(%arg4 : memref<!tpu.dma_semaphore, #tpu.memory_space<semaphore_mem>>)
    %c4_i32 = arith.constant 4 : i32
    %21 = arith.addi %0, %c4_i32 : i32
    %22 = arith.index_cast %21 : i32 to index
    %23 = memref.load %arg1[%22] : memref<16xi32, #tpu.memory_space<smem>>
    %c0_i32_8 = arith.constant 0 : i32
    %24 = tpu.memref_slice %arg2[%23, %c0_i32_8] : memref<64x128xf32, #tpu.memory_space<any>> -> memref<1x128xf32, #tpu.memory_space<any>>
    %c0_i32_9 = arith.constant 0 : i32
    %25 = tpu.memref_slice %arg3[%c4_i32, %c0_i32_9] : memref<8x128xf32, #tpu.memory_space<vmem>> -> memref<1x128xf32, #tpu.memory_space<vmem>>
    tpu.enqueue_dma source(%24 : memref<1x128xf32, #tpu.memory_space<any>>) target(%25 : memref<1x128xf32, #tpu.memory_space<vmem>>) target_semaphore(%arg4 : memref<!tpu.dma_semaphore, #tpu.memory_space<semaphore_mem>>)
    %c5_i32 = arith.constant 5 : i32
    %26 = arith.addi %0, %c5_i32 : i32
    %27 = arith.index_cast %26 : i32 to index
    %28 = memref.load %arg1[%27] : memref<16xi32, #tpu.memory_space<smem>>
    %c0_i32_10 = arith.constant 0 : i32
    %29 = tpu.memref_slice %arg2[%28, %c0_i32_10] : memref<64x128xf32, #tpu.memory_space<any>> -> memref<1x128xf32, #tpu.memory_space<any>>
    %c0_i32_11 = arith.constant 0 : i32
    %30 = tpu.memref_slice %arg3[%c5_i32, %c0_i32_11] : memref<8x128xf32, #tpu.memory_space<vmem>> -> memref<1x128xf32, #tpu.memory_space<vmem>>
    tpu.enqueue_dma source(%29 : memref<1x128xf32, #tpu.memory_space<any>>) target(%30 : memref<1x128xf32, #tpu.memory_space<vmem>>) target_semaphore(%arg4 : memref<!tpu.dma_semaphore, #tpu.memory_space<semaphore_mem>>)
    %c6_i32 = arith.constant 6 : i32
    %31 = arith.addi %0, %c6_i32 : i32
    %32 = arith.index_cast %31 : i32 to index
    %33 = memref.load %arg1[%32] : memref<16xi32, #tpu.memory_space<smem>>
    %c0_i32_12 = arith.constant 0 : i32
    %34 = tpu.memref_slice %arg2[%33, %c0_i32_12] : memref<64x128xf32, #tpu.memory_space<any>> -> memref<1x128xf32, #tpu.memory_space<any>>
    %c0_i32_13 = arith.constant 0 : i32
    %35 = tpu.memref_slice %arg3[%c6_i32, %c0_i32_13] : memref<8x128xf32, #tpu.memory_space<vmem>> -> memref<1x128xf32, #tpu.memory_space<vmem>>
    tpu.enqueue_dma source(%34 : memref<1x128xf32, #tpu.memory_space<any>>) target(%35 : memref<1x128xf32, #tpu.memory_space<vmem>>) target_semaphore(%arg4 : memref<!tpu.dma_semaphore, #tpu.memory_space<semaphore_mem>>)
    %c7_i32 = arith.constant 7 : i32
    %36 = arith.addi %0, %c7_i32 : i32
    %37 = arith.index_cast %36 : i32 to index
    %38 = memref.load %arg1[%37] : memref<16xi32, #tpu.memory_space<smem>>
    %c0_i32_14 = arith.constant 0 : i32
    %39 = tpu.memref_slice %arg2[%38, %c0_i32_14] : memref<64x128xf32, #tpu.memory_space<any>> -> memref<1x128xf32, #tpu.memory_space<any>>
    %c0_i32_15 = arith.constant 0 : i32
    %40 = tpu.memref_slice %arg3[%c7_i32, %c0_i32_15] : memref<8x128xf32, #tpu.memory_space<vmem>> -> memref<1x128xf32, #tpu.memory_space<vmem>>
    tpu.enqueue_dma source(%39 : memref<1x128xf32, #tpu.memory_space<any>>) target(%40 : memref<1x128xf32, #tpu.memory_space<vmem>>) target_semaphore(%arg4 : memref<!tpu.dma_semaphore, #tpu.memory_space<semaphore_mem>>)
    %c8_i32_16 = arith.constant 8 : i32
    tpu.wait_dma2 semaphore(%arg4 : memref<!tpu.dma_semaphore, #tpu.memory_space<semaphore_mem>>) src(%arg3 : memref<8x128xf32, #tpu.memory_space<vmem>>) dst(%arg3 : memref<8x128xf32, #tpu.memory_space<vmem>>)
    %c0 = arith.constant 0 : index
    %c0_17 = arith.constant 0 : index
    %41 = vector.load %arg3[%c0, %c0_17] : memref<8x128xf32, #tpu.memory_space<vmem>>, vector<8x128xf32>
    %cst = arith.constant 5.65685415 : f32
    %42 = vector.broadcast %cst : f32 to vector<8x128xf32>
    %43 = arith.mulf %41, %42 : vector<8x128xf32>
    %c0_18 = arith.constant 0 : index
    %c0_19 = arith.constant 0 : index
    %44 = vector.load %arg3[%c0_18, %c0_19] : memref<8x128xf32, #tpu.memory_space<vmem>>, vector<8x128xf32>
    tpu.vector_store %arg3[%c0_18, %c0_19], %43 {strides = array<i32>} : memref<8x128xf32, #tpu.memory_space<vmem>>, vector<8x128xf32>,
    return
  }
  func.func @transform_1(%arg0: i32, %arg1: memref<16xi32, #tpu.memory_space<smem>>) -> (i32, i32) {
    %c0_i32 = arith.constant 0 : i32
    %c0_i32_0 = arith.constant 0 : i32
    return %arg0, %c0_i32 : i32, i32
  }
}

</mosaic_0001>

<llo_original>
// kernel: tpu_custom_call.1
$region0: #{tpu_custom_call.1}
  #allocation0 [shape = 'u32[]', space=smem, size = 0x4, offset = 0x4, fixed_abs, tag = 'smem constant byte address 0x4 - core index']
  #allocation1 [shape = 'u32[144,128]{1,0:T(1,128)}', space=vmem, size = 0x12000, scoped, tag = 'internal scratch']
  #allocation2 [shape = 's32[1]{0}', space=sflag, size = 0x4, scoped, tag = 'scratch operand']
  #allocation3 [shape = 's32[1]{0}', space=sflag, size = 0x4, scoped, tag = 'scoped memory for tpu_custom_call.1']
  #allocation4 [shape = 'u8[512]{0}', space=smem, size = 0x200, scoped, tag = 'prefetched SMEM operand 0']
  #allocation7 [shape = 's32[]', space=sflag, size = 0x4, offset = 0, fixed_abs, tag = 'sflag constant byte address 0x0 - dummy sync flag']
  #allocation8 [shape = 's32[]', space=sflag, size = 0x4, offset = 0, fixed_abs, tag = 'sflag constant byte address 0x0 - dummy sync flag']
  #allocation9 [shape = 'u32[]', space=smem, size = 0x4, offset = 0x44, fixed_abs, tag = 'smem constant byte address 0x44 - assertion arg 0']
  #allocation10 [shape = 'u32[]', space=smem, size = 0x4, offset = 0x48, fixed_abs, tag = 'smem constant byte address 0x48 - assertion arg 1']
  #allocation11 [shape = 's32[]', space=sflag, size = 0x4, offset = 0, fixed_abs, tag = 'sflag constant byte address 0x0 - dummy sync flag']
  #allocation12 [shape = 's32[]', space=sflag, size = 0x4, offset = 0, fixed_abs, tag = 'sflag constant byte address 0x0 - dummy sync flag']
  #allocation13 [shape = 's32[]', space=sflag, size = 0x4, offset = 0, fixed_abs, tag = 'sflag constant byte address 0x0 - dummy sync flag']
  #allocation14 [shape = 's32[]', space=sflag, size = 0x4, offset = 0, fixed_abs, tag = 'sflag constant byte address 0x0 - dummy sync flag']
  #allocation15 [shape = 's32[]', space=sflag, size = 0x4, offset = 0, fixed_abs, tag = 'sflag constant byte address 0x0 - dummy sync flag']
  #allocation16 [shape = 's32[]', space=sflag, size = 0x4, offset = 0, fixed_abs, tag = 'sflag constant byte address 0x0 - dummy sync flag']
  #allocation17 [shape = 's32[]', space=sflag, size = 0x4, offset = 0, fixed_abs, tag = 'sflag constant byte address 0x0 - dummy sync flag']
  #allocation18 [shape = 's32[]', space=sflag, size = 0x4, offset = 0, fixed_abs, tag = 'sflag constant byte address 0x0 - dummy sync flag']
  #allocation19 [shape = 's32[]', space=sflag, size = 0x4, offset = 0, fixed_abs, tag = 'sflag constant byte address 0x0 - dummy sync flag']
  #allocation20 [shape = 's32[]', space=sflag, size = 0x4, offset = 0, fixed_abs, tag = 'sflag constant byte address 0x0 - dummy sync flag']
  #allocation21 [shape = 's32[]', space=sflag, size = 0x4, offset = 0, fixed_abs, tag = 'sflag constant byte address 0x0 - dummy sync flag']
  #allocation22 [shape = 's32[]', space=sflag, size = 0x4, offset = 0, fixed_abs, tag = 'sflag constant byte address 0x0 - dummy sync flag']
  #allocation23 [shape = 's32[]', space=sflag, size = 0x4, offset = 0, fixed_abs, tag = 'sflag constant byte address 0x0 - dummy sync flag']
  #allocation24 [shape = 's32[]', space=sflag, size = 0x4, offset = 0, fixed_abs, tag = 'sflag constant byte address 0x0 - dummy sync flag']
  %s0 = inlined_call_operand.hbm [shape: s32[16], index: 0, kind: input, shape index: {}]
  %s1 = inlined_call_operand.hbm [shape: f32[64,128], index: 1, kind: input, shape index: {}]
  %s2 = inlined_call_operand.hbm [shape: f32[16,128], index: 2, kind: output, shape index: {}]
  %s3 = sld [smem:[#allocation0]]
  $region57: #{tpu_custom_call.1} parent=0
    _
  %s5 = ssub.s32 1, %s3
  %s6 = scalar_select 0, %s5, %s3
  %8 = dma.hbm_to_smem %s0, 16, [#allocation4], [#allocation3]
  %9 = dma.done [#allocation3], 16
  %10 = sfence
  $region1: #{tpu_custom_call.1} parent=0
    #allocation5 [shape = 'u8[8192]{0}', space=vmem, size = 0x2000, scoped, tag = 'output window, operand 0']
    #allocation6 [shape = 's32[2]{0}', space=sflag, size = 0x8, scoped, tag = 'scoped memory for tpu_custom_call.1']
    %11 = vsyncpa [#allocation6], 0
    %s12 = scalar_lea.sflag [#allocation6], 1
    %13 = vsyncpa %s12, 0
    loop: start=0, step=1, limit=3
    $region2: #{tpu_custom_call.1} parent=1 // loop_pre_header
      _
    $region3: #{tpu_custom_call.1} parent=1 // loop_header
      %s15 = sphi 0, %s19
      %p16 = scmp.ge.s32.totalorder %s15, 3
      %s24 = sphi 0, %s26
      %s27 = sphi 0, %s24
      %s37 = sphi 0, %s27
    $region4: #{tpu_custom_call.1} parent=1 // loop_header_branch
      %18 = sbr.rel (%p16) target = $region8
    $region5: #{tpu_custom_call.1} parent=1 // loop_body
      %s20 = ssub.s32 %s15, 1
      %s21 = sadd.s32 %s15, 1
      %s22 = ssub.s32 %s15, %s21
      %p23 = scmp.eq.s32.totalorder %s22, 0
      %s25 = sadd.s32 %s24, 1
      %s26 = scalar_select %p23, %s24, %s25
      %p28 = pneg %p23
      %p29 = scmp.eq.s32.totalorder %s15, 1
      %p30 = por %p28, %p29
      %p31 = scmp.ne.s32.totalorder %s24, %s27
      %p32 = scmp.eq.s32.totalorder %s15, 0
      %p33 = por %p31, %p32
      %p34 = scmp.ne.s32.totalorder %s24, %s27
      %p35 = scmp.eq.s32.totalorder %s20, 1
      %p36 = por %p34, %p35
      %p38 = scmp.ne.s32.totalorder %s27, %s37
      %p39 = scmp.eq.s32.totalorder %s20, 0
      %p40 = por %p38, %p39
      %p41 = scmp.lt.s32.totalorder %s15, 2
      // Predicated region
      $region9: #{tpu_custom_call.1} parent=5 // pred_check
        %p42 = pneg %p41
      $region10: #{tpu_custom_call.1} parent=5 // pred_check_branch
        %44 = sbr.rel (%p42) target = $region12
      $region11: #{tpu_custom_call.1} parent=5 // pred_region
        %p45 = pneg %p33
        %p46 = pneg %p30
        %s47 = sand.u32 %s24, 1
        %s48 = scalar_lea.sflag [#allocation6], %s47
        %s49 = sand.u32 %s24, 1
        %s50 = smul.addr %s49, 8
        %s51 = scalar_lea.vmem [#allocation5], %s50
        %s52 = smul.u32 %s15, 8
        %s53 = sld [smem:[#allocation4 + %s52]]
        %s54 = smul.addr %s53, 16
        %s55 = scalar_lea.hbm %s1, %s54
        // Predicated region
        $region13: #{tpu_custom_call.1} parent=11 // pred_check
          _
        $region14: #{tpu_custom_call.1} parent=11 // pred_check_branch
          %57 = sbr.rel target = $region16
        $region15: #{tpu_custom_call.1} parent=11 // pred_region
          %58 = sst [smem:[#allocation9]] [#allocation8]
          %59 = sst [smem:[#allocation10]] [#allocation7]
        $region16: #{tpu_custom_call.1} parent=11 // pred_fallthru
          _
        %61 = shalt.err (0)
        %s63 = sshll.u32 %s51, 4
        %s64 = int_to_ptr.vmem [resolvable:$true] %s63
        %66 = dma.hbm_to_vmem [thread:$0]  %s55, 16, %s64, [#allocation2]
        %s67 = sadd.s32 %s52, 1
        %s68 = sld [smem:[#allocation4 + %s67]]
        %s69 = smul.addr %s68, 16
        %s70 = scalar_lea.hbm %s1, %s69
        %s71 = scalar_lea.vmem %s51, 1 [#allocation5]
        // Predicated region
        $region17: #{tpu_custom_call.1} parent=11 // pred_check
          _
        $region18: #{tpu_custom_call.1} parent=11 // pred_check_branch
          %73 = sbr.rel target = $region20
        $region19: #{tpu_custom_call.1} parent=11 // pred_region
          %74 = sst [smem:[#allocation9]] [#allocation12]
          %75 = sst [smem:[#allocation10]] [#allocation11]
        $region20: #{tpu_custom_call.1} parent=11 // pred_fallthru
          _
        %77 = shalt.err (0)
        %s79 = sshll.u32 %s71, 4
        %s80 = int_to_ptr.vmem [resolvable:$true] %s79
        %82 = dma.hbm_to_vmem [thread:$0]  %s70, 16, %s80, [#allocation2]
        %s83 = sadd.s32 %s52, 2
        %s84 = sld [smem:[#allocation4 + %s83]]
        %s85 = smul.addr %s84, 16
        %s86 = scalar_lea.hbm %s1, %s85
        %s87 = scalar_lea.vmem %s51, 2 [#allocation5]
        // Predicated region
        $region21: #{tpu_custom_call.1} parent=11 // pred_check
          _
        $region22: #{tpu_custom_call.1} parent=11 // pred_check_branch
          %89 = sbr.rel target = $region24
        $region23: #{tpu_custom_call.1} parent=11 // pred_region
          %90 = sst [smem:[#allocation9]] [#allocation14]
          %91 = sst [smem:[#allocation10]] [#allocation13]
        $region24: #{tpu_custom_call.1} parent=11 // pred_fallthru
          _
        %93 = shalt.err (0)
        %s95 = sshll.u32 %s87, 4
        %s96 = int_to_ptr.vmem [resolvable:$true] %s95
        %98 = dma.hbm_to_vmem [thread:$0]  %s86, 16, %s96, [#allocation2]
        %s99 = sadd.s32 %s52, 3
        %s100 = sld [smem:[#allocation4 + %s99]]
        %s101 = smul.addr %s100, 16
        %s102 = scalar_lea.hbm %s1, %s101
        %s103 = scalar_lea.vmem %s51, 3 [#allocation5]
        // Predicated region
        $region25: #{tpu_custom_call.1} parent=11 // pred_check
          _
        $region26: #{tpu_custom_call.1} parent=11 // pred_check_branch
          %105 = sbr.rel target = $region28
        $region27: #{tpu_custom_call.1} parent=11 // pred_region
          %106 = sst [smem:[#allocation9]] [#allocation16]
          %107 = sst [smem:[#allocation10]] [#allocation15]
        $region28: #{tpu_custom_call.1} parent=11 // pred_fallthru
          _
        %109 = shalt.err (0)
        %s111 = sshll.u32 %s103, 4
        %s112 = int_to_ptr.vmem [resolvable:$true] %s111
        %114 = dma.hbm_to_vmem [thread:$0]  %s102, 16, %s112, [#allocation2]
        %s115 = sadd.s32 %s52, 4
        %s116 = sld [smem:[#allocation4 + %s115]]
        %s117 = smul.addr %s116, 16
        %s118 = scalar_lea.hbm %s1, %s117
        %s119 = scalar_lea.vmem %s51, 4 [#allocation5]
        // Predicated region
        $region29: #{tpu_custom_call.1} parent=11 // pred_check
          _
        $region30: #{tpu_custom_call.1} parent=11 // pred_check_branch
          %121 = sbr.rel target = $region32
        $region31: #{tpu_custom_call.1} parent=11 // pred_region
          %122 = sst [smem:[#allocation9]] [#allocation18]
          %123 = sst [smem:[#allocation10]] [#allocation17]
        $region32: #{tpu_custom_call.1} parent=11 // pred_fallthru
          _
        %125 = shalt.err (0)
        %s127 = sshll.u32 %s119, 4
        %s128 = int_to_ptr.vmem [resolvable:$true] %s127
        %130 = dma.hbm_to_vmem [thread:$0]  %s118, 16, %s128, [#allocation2]
        %s131 = sadd.s32 %s52, 5
        %s132 = sld [smem:[#allocation4 + %s131]]
        %s133 = smul.addr %s132, 16
        %s134 = scalar_lea.hbm %s1, %s133
        %s135 = scalar_lea.vmem %s51, 5 [#allocation5]
        // Predicated region
        $region33: #{tpu_custom_call.1} parent=11 // pred_check
          _
        $region34: #{tpu_custom_call.1} parent=11 // pred_check_branch
          %137 = sbr.rel target = $region36
        $region35: #{tpu_custom_call.1} parent=11 // pred_region
          %138 = sst [smem:[#allocation9]] [#allocation20]
          %139 = sst [smem:[#allocation10]] [#allocation19]
        $region36: #{tpu_custom_call.1} parent=11 // pred_fallthru
          _
        %141 = shalt.err (0)
        %s143 = sshll.u32 %s135, 4
        %s144 = int_to_ptr.vmem [resolvable:$true] %s143
        %146 = dma.hbm_to_vmem [thread:$0]  %s134, 16, %s144, [#allocation2]
        %s147 = sadd.s32 %s52, 6
        %s148 = sld [smem:[#allocation4 + %s147]]
        %s149 = smul.addr %s148, 16
        %s150 = scalar_lea.hbm %s1, %s149
        %s151 = scalar_lea.vmem %s51, 6 [#allocation5]
        // Predicated region
        $region37: #{tpu_custom_call.1} parent=11 // pred_check
          _
        $region38: #{tpu_custom_call.1} parent=11 // pred_check_branch
          %153 = sbr.rel target = $region40
        $region39: #{tpu_custom_call.1} parent=11 // pred_region
          %154 = sst [smem:[#allocation9]] [#allocation22]
          %155 = sst [smem:[#allocation10]] [#allocation21]
        $region40: #{tpu_custom_call.1} parent=11 // pred_fallthru
          _
        %157 = shalt.err (0)
        %s159 = sshll.u32 %s151, 4
        %s160 = int_to_ptr.vmem [resolvable:$true] %s159
        %162 = dma.hbm_to_vmem [thread:$0]  %s150, 16, %s160, [#allocation2]
        %s163 = sadd.s32 %s52, 7
        %s164 = sld [smem:[#allocation4 + %s163]]
        %s165 = smul.addr %s164, 16
        %s166 = scalar_lea.hbm %s1, %s165
        %s167 = scalar_lea.vmem %s51, 7 [#allocation5]
        // Predicated region
        $region41: #{tpu_custom_call.1} parent=11 // pred_check
          _
        $region42: #{tpu_custom_call.1} parent=11 // pred_check_branch
          %169 = sbr.rel target = $region44
        $region43: #{tpu_custom_call.1} parent=11 // pred_region
          %170 = sst [smem:[#allocation9]] [#allocation24]
          %171 = sst [smem:[#allocation10]] [#allocation23]
        $region44: #{tpu_custom_call.1} parent=11 // pred_fallthru
          _
        %173 = shalt.err (0)
        %s175 = sshll.u32 %s167, 4
        %s176 = int_to_ptr.vmem [resolvable:$true] %s175
        %178 = dma.hbm_to_vmem [thread:$0]  %s166, 16, %s176, [#allocation2]
        %s179 = smul.u32 8, 1
        %s180 = sshll.u32 %s179, 4
        %181 = dma.done [#allocation2], %s180
        %v182 = vld [vmem:[%s51] sm:$0xff]
        %v183 = vmul.f32 %v182, 5.656854
        %184 = vst [vmem:[%s51] sm:$0xff] %v183
        %s185 = sand.u32 %s24, 1
        %s186 = scalar_lea.sflag [#allocation6], %s185
        %s187 = sand.u32 %s24, 1
        %s188 = smul.addr %s187, 8
        %s189 = scalar_lea.vmem [#allocation5], %s188
        // Predicated region
        $region45: #{tpu_custom_call.1} parent=11 // pred_check
          %p190 = pneg %p30
        $region46: #{tpu_custom_call.1} parent=11 // pred_check_branch
          %192 = sbr.rel (%p190) target = $region48
        $region47: #{tpu_custom_call.1} parent=11 // pred_region
          %s194 = ssub.s32 128, 128
          %195 = vsyncadd %s186, %s194
          %s196 = smul.addr %s15, 128
          %s197 = scalar_lea.hbm %s2, %s196
          %s199 = sshll.u32 %s189, 4
          %s200 = int_to_ptr.vmem [resolvable:$true] %s199
          %202 = dma.vmem_to_hbm [thread:$0]  %s200, 128, %s197, %s186
        $region48: #{tpu_custom_call.1} parent=11 // pred_fallthru
          _
      $region12: #{tpu_custom_call.1} parent=5 // pred_fallthru
        _
      %p203 = scmp.le.s32.totalorder 1, %s15
      // Predicated region
      $region49: #{tpu_custom_call.1} parent=5 // pred_check
        %p204 = pneg %p203
      $region50: #{tpu_custom_call.1} parent=5 // pred_check_branch
        %206 = sbr.rel (%p204) target = $region52
      $region51: #{tpu_custom_call.1} parent=5 // pred_region
        %s207 = ssub.s32 %s15, 1
        // Predicated region
        $region53: #{tpu_custom_call.1} parent=51 // pred_check
          %p208 = pneg %p36
        $region54: #{tpu_custom_call.1} parent=51 // pred_check_branch
          %210 = sbr.rel (%p208) target = $region56
        $region55: #{tpu_custom_call.1} parent=51 // pred_region
          %s211 = sand.u32 %s27, 1
          %s212 = scalar_lea.sflag [#allocation6], %s211
          %s213 = sand.u32 %s27, 1
          %s214 = smul.addr %s213, 8
          %s215 = scalar_lea.vmem [#allocation5], %s214
          %216 = dma.done %s212, 128
        $region56: #{tpu_custom_call.1} parent=51 // pred_fallthru
          _
      $region52: #{tpu_custom_call.1} parent=5 // pred_fallthru
        _
    $region6: #{tpu_custom_call.1} parent=1 // loop_footer
      %s19 = sadd.s32 1, %s15
    $region7: #{tpu_custom_call.1} parent=1 // loop_footer_branch
      %14 = sbr.rel target = $region3
    $region8: #{tpu_custom_call.1} parent=1 // loop_exit
      _
    %217 = vsyncpa [#allocation6], 1
    %s218 = scalar_lea.sflag [#allocation6], 1
    %219 = vsyncpa %s218, 1
  %220 = vsyncmov [#allocation2]
  %s221 = vpop.sfrf %220
  %p222 = scmp.eq.s32.totalorder %s221, 0
  %p223 = pneg %p222
  %225 = shalt.err (%p223)

</llo_original>
